<compile_context>
chip_gen: v5e
topology: v5e:2x2
jax: 0.10.0
libtpu: 0.0.40
codegen_flags: <defaults>
</compile_context>

<pallas_src>
import functools

import jax
import jax.numpy as jnp
from jax.experimental import pallas as pl
from jax.experimental.pallas import tpu as pltpu

EPS = 1e-6


# --------------------------------------------------------------------------
# Hardware-aware budgeting helpers
# --------------------------------------------------------------------------
def _round_up(n, m):
    return ((n + m - 1) // m) * m


def _tpu_generation():
    """Best-effort TPU generation (5, 6, 7, ...); 0 if unknown."""
    try:
        kind = jax.devices()[0].device_kind.lower()
    except Exception:
        return 0
    for g in (7, 6, 5, 4, 3, 2):
        if "v%d" % g in kind:
            return g
    return 0


def _vmem_budget_bytes(gen):
    """VMEM bytes we allow the kernel to use (physical minus ~20% headroom)."""
    try:
        phys = int(pltpu.get_tpu_info().vmem_capacity_bytes)
    except Exception:
        phys = (64 if gen >= 7 else 128) * 1024 * 1024
    return max(16 * 1024 * 1024, int(phys * 0.8))


def _footprint_bytes(tm, fc, D, with_acc):
    """Rough per-grid-step VMEM footprint (double-buffered inputs/outputs)."""
    b = 2 * tm * D * 4          # x tile, f32, double-buffered
    b += 2 * tm * D * 4         # out tile, f32, double-buffered
    b += tm * D * 2             # normed (bf16): scratch or in-register estimate
    if with_acc:
        b += tm * D * 4         # f32 accumulator scratch
    b += 2 * 2 * 2 * D * fc     # bf16 W1 + W2 chunks, double-buffered
    b += 4 * 4 * (2 * D + fc)   # gamma/beta/b1/b2 (generous)
    return b


def _split_for_two_cores(tm, rows):
    """Halve tm (32-aligned) if the row axis would have a single grid step."""
    rows_p = _round_up(rows, tm)
    if rows_p // tm >= 2:
        return tm
    half = _round_up((rows + 1) // 2, 32)
    if 32 <= half < tm and rows > half:
        return half
    return tm


def _choose_tiling(rows, D, F, budget, want_two_row_tiles):
    """Return (tm, fc, resident). fc == F and resident=True => single d_ff step."""
    rows32 = max(32, _round_up(rows, 32))
    tm_cands = sorted(
        {t for t in (1024, 768, 512, 384, 256, 128, 64, 32) if t <= rows32}
        | {rows32},
        reverse=True,
    )
    fc_cands = [c for c in (1024, 512, 256, 128) if c < F and F % c == 0]

    def finish(tm, fc, resident):
        if want_two_row_tiles:
            tm = _split_for_two_cores(tm, rows)
        return tm, fc, resident

    # 1) weights-resident fast path (fc = F, no accumulator).
    best = None
    for tm in tm_cands:
        if _footprint_bytes(tm, F, D, with_acc=False) > budget:
            continue
        rp = _round_up(rows, tm)
        key = (rp, -tm)                      # least padding, then biggest tile
        if best is None or key < best[0]:
            best = (key, tm)
    if best is not None:
        return finish(best[1], F, True)

    # 2) chunked d_ff: maximize row tile first (weight re-stream ~ 1/tm), then fc.
    best = None
    for tm in tm_cands:
        rp = _round_up(rows, tm)
        ntiles = rp // tm
        for fc in fc_cands:
            if _footprint_bytes(tm, fc, D, with_acc=True) <= budget:
                key = (ntiles, rp, -fc)
                if best is None or key < best[0]:
                    best = (key, tm, fc)
                break                        # largest fitting fc for this tm
    if best is not None:
        return finish(best[1], best[2], False)

    # 3) fallback: smallest tiles (tiny / odd shapes); budget estimate ignored.
    fc = fc_cands[-1] if fc_cands else F
    return finish(min(32, rows32), fc, fc == F)


# --------------------------------------------------------------------------
# Kernels
# --------------------------------------------------------------------------
def _sublayer_kernel_resident(x_ref, gamma_ref, beta_ref, w1_ref, b1_ref,
                              w2_ref, b2_ref, o_ref, *, bf16_ew):
    """Single d_ff step: weights fully resident, no accumulator scratch."""
    x = x_ref[...].astype(jnp.float32)
    d = x.shape[-1]
    # PyTorch Sublayer's LayerNorm: unbiased std (ddof=1), eps added to std.
    mean = jnp.mean(x, axis=-1, keepdims=True)
    diff = x - mean
    var = jnp.sum(diff * diff, axis=-1, keepdims=True) / (d - 1)
    inv = 1.0 / (jnp.sqrt(var) + EPS)        # exact; once per row tile
    normed = (gamma_ref[...] * (diff * inv) + beta_ref[...]).astype(jnp.bfloat16)

    h = jnp.dot(normed, w1_ref[...], preferred_element_type=jnp.float32)
    if bf16_ew:                               # v6e/v7x: bf16 VALUs
        h = jnp.maximum(h.astype(jnp.bfloat16) + b1_ref[...].astype(jnp.bfloat16),
                        0.0)
    else:                                     # v5e: keep elementwise in f32
        h = jnp.maximum(h + b1_ref[...], 0.0).astype(jnp.bfloat16)

    y = jnp.dot(h, w2_ref[...], preferred_element_type=jnp.float32) + b2_ref[...]
    # dropout = identity (eval mode); residual add.
    o_ref[...] = (x + y).astype(o_ref.dtype)


def _sublayer_kernel_chunked(x_ref, gamma_ref, beta_ref, w1_ref, b1_ref,
                             w2_ref, b2_ref, o_ref, normed_ref, acc_ref,
                             *, bf16_ew):
    """grid = (row_tiles, F_chunks); axis 1 is the d_ff reduction."""
    k = pl.program_id(1)
    nk = pl.num_programs(1)

    # ---- per-row-tile init: LayerNorm once (cached), zero the accumulator --
    @pl.when(k == 0)
    def _():
        x = x_ref[...].astype(jnp.float32)
        d = x.shape[-1]
        mean = jnp.mean(x, axis=-1, keepdims=True)
        diff = x - mean
        var = jnp.sum(diff * diff, axis=-1, keepdims=True) / (d - 1)
        inv = 1.0 / (jnp.sqrt(var) + EPS)     # exact; once per row tile
        normed_ref[...] = (gamma_ref[...] * (diff * inv)
                           + beta_ref[...]).astype(jnp.bfloat16)
        acc_ref[...] = jnp.zeros_like(acc_ref)

    # ---- one d_ff chunk: bf16 matmuls, f32 accumulation --------------------
    h = jnp.dot(normed_ref[...], w1_ref[...], preferred_element_type=jnp.float32)
    if bf16_ew:
        h = jnp.maximum(h.astype(jnp.bfloat16) + b1_ref[...].astype(jnp.bfloat16),
                        0.0)
    else:
        h = jnp.maximum(h + b1_ref[...], 0.0).astype(jnp.bfloat16)
    acc_ref[...] += jnp.dot(h, w2_ref[...], preferred_element_type=jnp.float32)

    # ---- finalize: second bias + dropout(identity) + residual --------------
    @pl.when(k == nk - 1)
    def _():
        y = acc_ref[...] + b2_ref[...]
        o_ref[...] = (x_ref[...].astype(jnp.float32) + y).astype(o_ref.dtype)


# --------------------------------------------------------------------------
# Wrapper
# --------------------------------------------------------------------------
def sublayer_forward(x, gamma, beta, w1, b1, w2, b2):
    """x: [B, S, D] float32 -> [B, S, D]."""
    B, S, D = x.shape
    F = w1.shape[1]
    rows = B * S

    gen = _tpu_generation()
    bf16_ew = gen >= 6                 # v6e/v7x have bf16 VALUs; v5e does not
    want_two = gen >= 7                # 2 TensorCores per chip on v7x
    vmem_limit = _vmem_budget_bytes(gen)

    tm, fc, resident = _choose_tiling(rows, D, F, int(vmem_limit * 0.9),
                                      want_two)
    rows_p = _round_up(rows, tm)

    x2 = x.reshape(rows, D)
    if rows_p != rows:
        x2 = jnp.pad(x2, ((0, rows_p - rows), (0, 0)))

    gamma2 = gamma.reshape(1, D).astype(jnp.float32)
    beta2 = beta.reshape(1, D).astype(jnp.float32)
    b1_2 = b1.reshape(1, F).astype(jnp.float32)
    b2_2 = b2.reshape(1, D).astype(jnp.float32)
    w1_bf = w1.astype(jnp.bfloat16)
    w2_bf = w2.astype(jnp.bfloat16)

    if resident:
        # Weights DMA'd once, stay in VMEM across all row tiles.
        kernel = functools.partial(_sublayer_kernel_resident, bf16_ew=bf16_ew)
        grid = (rows_p // tm,)
        in_specs = [
            pl.BlockSpec((tm, D), lambda i: (i, 0)),   # x rows
            pl.BlockSpec((1, D), lambda i: (0, 0)),    # gamma
            pl.BlockSpec((1, D), lambda i: (0, 0)),    # beta
            pl.BlockSpec((D, F), lambda i: (0, 0)),    # W1 (grid-invariant)
            pl.BlockSpec((1, F), lambda i: (0, 0)),    # b1
            pl.BlockSpec((F, D), lambda i: (0, 0)),    # W2 (grid-invariant)
            pl.BlockSpec((1, D), lambda i: (0, 0)),    # b2
        ]
        out_specs = pl.BlockSpec((tm, D), lambda i: (i, 0))
        scratch_shapes = []
        dim_sem = ("parallel",)
    else:
        kernel = functools.partial(_sublayer_kernel_chunked, bf16_ew=bf16_ew)
        nk = F // fc
        grid = (rows_p // tm, nk)
        in_specs = [
            pl.BlockSpec((tm, D), lambda i, k: (i, 0)),   # x rows
            pl.BlockSpec((1, D), lambda i, k: (0, 0)),    # gamma
            pl.BlockSpec((1, D), lambda i, k: (0, 0)),    # beta
            pl.BlockSpec((D, fc), lambda i, k: (0, k)),   # W1 column chunk
            pl.BlockSpec((1, fc), lambda i, k: (0, k)),   # b1 chunk
            pl.BlockSpec((fc, D), lambda i, k: (k, 0)),   # W2 row chunk
            pl.BlockSpec((1, D), lambda i, k: (0, 0)),    # b2
        ]
        out_specs = pl.BlockSpec((tm, D), lambda i, k: (i, 0))
        scratch_shapes = [
            pltpu.VMEM((tm, D), jnp.bfloat16),   # cached LayerNorm output
            pltpu.VMEM((tm, D), jnp.float32),    # FFN accumulator
        ]
        dim_sem = ("parallel", "arbitrary")

    out = pl.pallas_call(
        kernel,
        out_shape=jax.ShapeDtypeStruct((rows_p, D), x.dtype),
        grid_spec=pltpu.PrefetchScalarGridSpec(
            num_scalar_prefetch=0,
            grid=grid,
            in_specs=in_specs,
            out_specs=out_specs,
            scratch_shapes=scratch_shapes,
        ),
        compiler_params=pltpu.CompilerParams(
            dimension_semantics=dim_sem,
            vmem_limit_bytes=vmem_limit,
        ),
    )(x2, gamma2, beta2, w1_bf, b1_2, w2_bf, b2_2)

    return out[:rows].reshape(B, S, D)


# --------------------------------------------------------------------------
# Pure-JAX reference (mirrors the PyTorch module, eval-mode dropout)
# --------------------------------------------------------------------------
def reference_forward(x, gamma, beta, w1, b1, w2, b2):
    mean = jnp.mean(x, axis=-1, keepdims=True)
    std = jnp.std(x, axis=-1, keepdims=True, ddof=1)   # torch.std is unbiased
    normed = gamma * (x - mean) / (std + EPS) + beta
    h = jnp.maximum(normed @ w1 + b1, 0.0)
    y = h @ w2 + b2
    return x + y                                       # dropout identity


if __name__ == "__main__":
    # Small but lane-dense demo shapes (D, F multiples of 128).
    B, S, D, F = 2, 8, 128, 256

    key = jax.random.PRNGKey(0)
    kx, kw1, kb1, kw2, kb2 = jax.random.split(key, 5)

    x = jax.random.normal(kx, (B, S, D), dtype=jnp.float32)

    # LayerNorm params as in __init__: ones / zeros
    gamma = jnp.ones((D,), dtype=jnp.float32)
    beta = jnp.zeros((D,), dtype=jnp.float32)

    # Deterministic FFN ("workhorse") params
    w1 = jax.random.normal(kw1, (D, F), dtype=jnp.float32) * 0.1
    b1 = jax.random.normal(kb1, (F,), dtype=jnp.float32) * 0.01
    w2 = jax.random.normal(kw2, (F, D), dtype=jnp.float32) * 0.1
    b2 = jax.random.normal(kb2, (D,), dtype=jnp.float32) * 0.01

    out = sublayer_forward(x, gamma, beta, w1, b1, w2, b2)
    out = jax.block_until_ready(out)

    ref = reference_forward(x, gamma, beta, w1, b1, w2, b2)
    assert out.shape == (B, S, D)
    # bf16 matmul weights (and bf16 epilogue on v6e/v7x) vs f32 reference.
    assert jnp.allclose(out, ref, atol=5e-2, rtol=5e-2), "mismatch vs reference"

    print("KERNEL_OK")
</pallas_src>

<mosaic_0001>
module attributes {stable_mosaic.version = 11 : i64} {
  func.func @_sublayer_kernel_resident(%arg0: i32, %arg1: memref<32x128xf32, #tpu.memory_space<vmem>>, %arg2: memref<1x128xf32, #tpu.memory_space<vmem>>, %arg3: memref<1x128xf32, #tpu.memory_space<vmem>>, %arg4: memref<128x256xbf16, #tpu.memory_space<vmem>>, %arg5: memref<1x256xf32, #tpu.memory_space<vmem>>, %arg6: memref<256x128xbf16, #tpu.memory_space<vmem>>, %arg7: memref<1x128xf32, #tpu.memory_space<vmem>>, %arg8: memref<32x128xf32, #tpu.memory_space<vmem>>) attributes {dimension_semantics = [#tpu.dimension_semantics<parallel>], iteration_bounds = array<i64: 1>, scalar_prefetch = 0 : i64, scratch_operands = 0 : i64, tpu.core_type = #tpu.core_type<tc>, window_params = [{transform_indices = @transform_0, window_bounds = array<i64: 32, 128>}, {pipeline_mode = #tpu.pipeline_mode<synchronous>, transform_indices = @transform_1, window_bounds = array<i64: 1, 128>}, {pipeline_mode = #tpu.pipeline_mode<synchronous>, transform_indices = @transform_2, window_bounds = array<i64: 1, 128>}, {pipeline_mode = #tpu.pipeline_mode<synchronous>, transform_indices = @transform_3, window_bounds = array<i64: 128, 256>}, {pipeline_mode = #tpu.pipeline_mode<synchronous>, transform_indices = @transform_4, window_bounds = array<i64: 1, 256>}, {pipeline_mode = #tpu.pipeline_mode<synchronous>, transform_indices = @transform_5, window_bounds = array<i64: 256, 128>}, {pipeline_mode = #tpu.pipeline_mode<synchronous>, transform_indices = @transform_6, window_bounds = array<i64: 1, 128>}, {transform_indices = @transform_7, window_bounds = array<i64: 32, 128>}]} {
    %c0 = arith.constant 0 : index
    %c0_0 = arith.constant 0 : index
    %0 = vector.load %arg1[%c0, %c0_0] : memref<32x128xf32, #tpu.memory_space<vmem>>, vector<32x128xf32>
    %cst = arith.constant dense<0.000000e+00> : vector<32xf32>
    %1 = vector.multi_reduction <add>, %0, %cst [1] : vector<32x128xf32> to vector<32xf32>
    %2 = vector.shape_cast %1 : vector<32xf32> to vector<32x1xf32>
    %cst_1 = arith.constant 1.280000e+02 : f32
    %3 = vector.broadcast %cst_1 : f32 to vector<32x1xf32>
    %4 = arith.divf %2, %3 : vector<32x1xf32>
    %5 = vector.broadcast %4 : vector<32x1xf32> to vector<32x128xf32>
    %6 = arith.subf %0, %5 : vector<32x128xf32>
    %7 = arith.mulf %6, %6 : vector<32x128xf32>
    %cst_2 = arith.constant dense<0.000000e+00> : vector<32xf32>
    %8 = vector.multi_reduction <add>, %7, %cst_2 [1] : vector<32x128xf32> to vector<32xf32>
    %9 = vector.shape_cast %8 : vector<32xf32> to vector<32x1xf32>
    %cst_3 = arith.constant 1.270000e+02 : f32
    %10 = vector.broadcast %cst_3 : f32 to vector<32x1xf32>
    %11 = arith.divf %9, %10 : vector<32x1xf32>
    %12 = math.sqrt %11 : vector<32x1xf32>
    %cst_4 = arith.constant 9.99999997E-7 : f32
    %13 = vector.broadcast %cst_4 : f32 to vector<32x1xf32>
    %14 = arith.addf %12, %13 : vector<32x1xf32>
    %cst_5 = arith.constant 1.000000e+00 : f32
    %15 = vector.broadcast %cst_5 : f32 to vector<32x1xf32>
    %16 = arith.divf %15, %14 : vector<32x1xf32>
    %c0_6 = arith.constant 0 : index
    %c0_7 = arith.constant 0 : index
    %17 = vector.load %arg2[%c0_6, %c0_7] : memref<1x128xf32, #tpu.memory_space<vmem>>, vector<1x128xf32>
    %18 = vector.broadcast %16 : vector<32x1xf32> to vector<32x128xf32>
    %19 = arith.mulf %6, %18 : vector<32x128xf32>
    %20 = vector.broadcast %17 : vector<1x128xf32> to vector<32x128xf32>
    %21 = arith.mulf %20, %19 : vector<32x128xf32>
    %c0_8 = arith.constant 0 : index
    %c0_9 = arith.constant 0 : index
    %22 = vector.load %arg3[%c0_8, %c0_9] : memref<1x128xf32, #tpu.memory_space<vmem>>, vector<1x128xf32>
    %23 = vector.broadcast %22 : vector<1x128xf32> to vector<32x128xf32>
    %24 = arith.addf %21, %23 : vector<32x128xf32>
    %25 = arith.truncf %24 : vector<32x128xf32> to vector<32x128xbf16>
    %c0_10 = arith.constant 0 : index
    %c0_11 = arith.constant 0 : index
    %26 = vector.load %arg4[%c0_10, %c0_11] : memref<128x256xbf16, #tpu.memory_space<vmem>>, vector<128x256xbf16>
    %cst_12 = arith.constant dense<0.000000e+00> : vector<32x256xf32>
    %27 = tpu.matmul %25, %26, %cst_12 {dimension_numbers = #tpu.dot_dimension_numbers<[1], [0], [0], [1], [0, 0, 1, 1], [], []>} : vector<32x128xbf16>, vector<128x256xbf16>, vector<32x256xf32> -> vector<32x256xf32>
    %c0_13 = arith.constant 0 : index
    %c0_14 = arith.constant 0 : index
    %28 = vector.load %arg5[%c0_13, %c0_14] : memref<1x256xf32, #tpu.memory_space<vmem>>, vector<1x256xf32>
    %29 = vector.broadcast %28 : vector<1x256xf32> to vector<32x256xf32>
    %30 = arith.addf %27, %29 : vector<32x256xf32>
    %cst_15 = arith.constant 0.000000e+00 : f32
    %31 = vector.broadcast %cst_15 : f32 to vector<32x256xf32>
    %32 = arith.maximumf %30, %31 : vector<32x256xf32>
    %33 = arith.truncf %32 : vector<32x256xf32> to vector<32x256xbf16>
    %c0_16 = arith.constant 0 : index
    %c0_17 = arith.constant 0 : index
    %34 = vector.load %arg6[%c0_16, %c0_17] : memref<256x128xbf16, #tpu.memory_space<vmem>>, vector<256x128xbf16>
    %cst_18 = arith.constant dense<0.000000e+00> : vector<32x128xf32>
    %35 = tpu.matmul %33, %34, %cst_18 {dimension_numbers = #tpu.dot_dimension_numbers<[1], [0], [0], [1], [0, 0, 1, 1], [], []>} : vector<32x256xbf16>, vector<256x128xbf16>, vector<32x128xf32> -> vector<32x128xf32>
    %c0_19 = arith.constant 0 : index
    %c0_20 = arith.constant 0 : index
    %36 = vector.load %arg7[%c0_19, %c0_20] : memref<1x128xf32, #tpu.memory_space<vmem>>, vector<1x128xf32>
    %37 = vector.broadcast %36 : vector<1x128xf32> to vector<32x128xf32>
    %38 = arith.addf %35, %37 : vector<32x128xf32>
    %39 = arith.addf %0, %38 : vector<32x128xf32>
    %c0_21 = arith.constant 0 : index
    %c0_22 = arith.constant 0 : index
    %40 = vector.load %arg8[%c0_21, %c0_22] : memref<32x128xf32, #tpu.memory_space<vmem>>, vector<32x128xf32>
    tpu.vector_store %arg8[%c0_21, %c0_22], %39 {strides = array<i32>} : memref<32x128xf32, #tpu.memory_space<vmem>>, vector<32x128xf32>,
    return
  }
  func.func @transform_0(%arg0: i32) -> (i32, i32) {
    %c0_i32 = arith.constant 0 : i32
    %c0_i32_0 = arith.constant 0 : i32
    return %arg0, %c0_i32 : i32, i32
  }
  func.func @transform_1(%arg0: i32) -> (i32, i32) {
    %c0_i32 = arith.constant 0 : i32
    %c0_i32_0 = arith.constant 0 : i32
    %c0_i32_1 = arith.constant 0 : i32
    return %c0_i32, %c0_i32_0 : i32, i32
  }
  func.func @transform_2(%arg0: i32) -> (i32, i32) {
    %c0_i32 = arith.constant 0 : i32
    %c0_i32_0 = arith.constant 0 : i32
    %c0_i32_1 = arith.constant 0 : i32
    return %c0_i32, %c0_i32_0 : i32, i32
  }
  func.func @transform_3(%arg0: i32) -> (i32, i32) {
    %c0_i32 = arith.constant 0 : i32
    %c0_i32_0 = arith.constant 0 : i32
    %c0_i32_1 = arith.constant 0 : i32
    return %c0_i32, %c0_i32_0 : i32, i32
  }
  func.func @transform_4(%arg0: i32) -> (i32, i32) {
    %c0_i32 = arith.constant 0 : i32
    %c0_i32_0 = arith.constant 0 : i32
    %c0_i32_1 = arith.constant 0 : i32
    return %c0_i32, %c0_i32_0 : i32, i32
  }
  func.func @transform_5(%arg0: i32) -> (i32, i32) {
    %c0_i32 = arith.constant 0 : i32
    %c0_i32_0 = arith.constant 0 : i32
    %c0_i32_1 = arith.constant 0 : i32
    return %c0_i32, %c0_i32_0 : i32, i32
  }
  func.func @transform_6(%arg0: i32) -> (i32, i32) {
    %c0_i32 = arith.constant 0 : i32
    %c0_i32_0 = arith.constant 0 : i32
    %c0_i32_1 = arith.constant 0 : i32
    return %c0_i32, %c0_i32_0 : i32, i32
  }
  func.func @transform_7(%arg0: i32) -> (i32, i32) {
    %c0_i32 = arith.constant 0 : i32
    %c0_i32_0 = arith.constant 0 : i32
    return %arg0, %c0_i32 : i32, i32
  }
}

</mosaic_0001>

<llo_original>
// kernel: tpu_custom_call.1
$region0: #{tpu_custom_call.1}
  #allocation0 [shape = 'u32[]', space=smem, size = 0x4, offset = 0x4, fixed_abs, tag = 'smem constant byte address 0x4 - core index']
  #allocation1 [shape = 'u32[72,128]{1,0:T(1,128)}', space=vmem, size = 0x9000, scoped, tag = 'internal scratch']
  %s0 = inlined_call_operand.hbm [shape: f32[32,128], index: 0, kind: input, shape index: {}]
  %s1 = inlined_call_operand.hbm [shape: f32[1,128], index: 1, kind: input, shape index: {}]
  %s2 = inlined_call_operand.vmem [shape: f32[1,128], index: 2, kind: input, shape index: {}]
  %s3 = inlined_call_operand.hbm [shape: bf16[128,256], index: 3, kind: input, shape index: {}]
  %s4 = inlined_call_operand.vmem [shape: f32[1,256], index: 4, kind: input, shape index: {}]
  %s5 = inlined_call_operand.hbm [shape: bf16[256,128], index: 5, kind: input, shape index: {}]
  %s6 = inlined_call_operand.vmem [shape: f32[1,128], index: 6, kind: input, shape index: {}]
  %s7 = inlined_call_operand.hbm [shape: f32[32,128], index: 7, kind: output, shape index: {}]
  %s8 = sld [smem:[#allocation0]]
  $region54: #{tpu_custom_call.1} parent=0
    _
  %s10 = ssub.s32 1, %s8
  %s11 = scalar_select 0, %s10, %s8
  $region1: #{tpu_custom_call.1} parent=0
    #allocation2 [shape = 'u8[16384]{0}', space=vmem, size = 0x4000, scoped, tag = 'input window, operand 0, single buffered']
    #allocation3 [shape = 's32[1]{0}', space=sflag, size = 0x4, scoped, tag = 'scoped memory for tpu_custom_call.1']
    #allocation4 [shape = 's32[1]{0}', space=sflag, size = 0x4, scoped, tag = 'scoped memory for tpu_custom_call.1']
    #allocation5 [shape = 'u8[512]{0}', space=vmem, size = 0x400, scoped, tag = 'input window, operand 1, single buffered']
    #allocation6 [shape = 's32[1]{0}', space=sflag, size = 0x4, scoped, tag = 'scoped memory for tpu_custom_call.1']
    #allocation7 [shape = 'u8[65536]{0}', space=vmem, size = 0x10000, scoped, tag = 'input window, operand 3, single buffered']
    #allocation8 [shape = 'u8[65536]{0}', space=vmem, size = 0x10000, scoped, tag = 'input window, operand 5, single buffered']
    #allocation9 [shape = 's32[1]{0}', space=sflag, size = 0x4, scoped, tag = 'scoped memory for tpu_custom_call.1']
    #allocation10 [shape = 'u8[16384]{0}', space=vmem, size = 0x4000, scoped, tag = 'output window, operand 0, single buffered']
    %12 = vsyncpa [#allocation3], 0
    %13 = vsyncpa [#allocation6], 0
    %14 = vsyncpa [#allocation9], 0
    %15 = vsyncpa [#allocation4], 0
    // Predicated region
    $region2: #{tpu_custom_call.1} parent=1 // pred_check
      _
    $region3: #{tpu_custom_call.1} parent=1 // pred_check_branch
      %17 = sbr.rel (0) target = $region5
    $region4: #{tpu_custom_call.1} parent=1 // pred_region
      %19 = vsyncadd [#allocation3], 0
      %s20 = sshll.u32 %s0, 4
      %s21 = int_to_ptr.hbm [resolvable:$true] %s20
      %s22 = sshll.u32 [#allocation2], 4
      %s23 = int_to_ptr.vmem [resolvable:$true] %s22
      %28 = dma.hbm_to_vmem [thread:$0]  %s21, 512, %s23, [#allocation3], 128, 128, 8
    $region5: #{tpu_custom_call.1} parent=1 // pred_fallthru
      _
    // Predicated region
    $region6: #{tpu_custom_call.1} parent=1 // pred_check
      _
    $region7: #{tpu_custom_call.1} parent=1 // pred_check_branch
      %30 = sbr.rel (0) target = $region9
    $region8: #{tpu_custom_call.1} parent=1 // pred_region
      %32 = vsyncadd [#allocation6], 0
      %s34 = sshll.u32 %s1, 4
      %s35 = int_to_ptr.hbm [resolvable:$true] %s34
      %s36 = sshll.u32 [#allocation5], 4
      %s37 = int_to_ptr.vmem [resolvable:$true] %s36
      %39 = dma.hbm_to_vmem [thread:$0]  %s35, 16, %s37, [#allocation6]
    $region9: #{tpu_custom_call.1} parent=1 // pred_fallthru
      _
    // Predicated region
    $region10: #{tpu_custom_call.1} parent=1 // pred_check
      _
    $region11: #{tpu_custom_call.1} parent=1 // pred_check_branch
      %41 = sbr.rel (0) target = $region13
    $region12: #{tpu_custom_call.1} parent=1 // pred_region
      _
    $region13: #{tpu_custom_call.1} parent=1 // pred_fallthru
      _
    // Predicated region
    $region14: #{tpu_custom_call.1} parent=1 // pred_check
      _
    $region15: #{tpu_custom_call.1} parent=1 // pred_check_branch
      %43 = sbr.rel (0) target = $region17
    $region16: #{tpu_custom_call.1} parent=1 // pred_region
      %45 = vsyncadd [#allocation6], 0
      %s46 = sshll.u32 %s3, 4
      %s47 = int_to_ptr.hbm [resolvable:$true] %s46
      %s48 = sshll.u32 [#allocation7], 4
      %s49 = int_to_ptr.vmem [resolvable:$true] %s48
      %54 = dma.hbm_to_vmem [thread:$0]  %s47, 2048, %s49, [#allocation6], 128, 128, 8
    $region17: #{tpu_custom_call.1} parent=1 // pred_fallthru
      _
    // Predicated region
    $region18: #{tpu_custom_call.1} parent=1 // pred_check
      _
    $region19: #{tpu_custom_call.1} parent=1 // pred_check_branch
      %56 = sbr.rel (0) target = $region21
    $region20: #{tpu_custom_call.1} parent=1 // pred_region
      _
    $region21: #{tpu_custom_call.1} parent=1 // pred_fallthru
      _
    // Predicated region
    $region22: #{tpu_custom_call.1} parent=1 // pred_check
      _
    $region23: #{tpu_custom_call.1} parent=1 // pred_check_branch
      %58 = sbr.rel (0) target = $region25
    $region24: #{tpu_custom_call.1} parent=1 // pred_region
      %60 = vsyncadd [#allocation9], 0
      %s61 = sshll.u32 %s5, 4
      %s62 = int_to_ptr.hbm [resolvable:$true] %s61
      %s63 = sshll.u32 [#allocation8], 4
      %s64 = int_to_ptr.vmem [resolvable:$true] %s63
      %69 = dma.hbm_to_vmem [thread:$0]  %s62, 2048, %s64, [#allocation9], 64, 64, 4
    $region25: #{tpu_custom_call.1} parent=1 // pred_fallthru
      _
    // Predicated region
    $region26: #{tpu_custom_call.1} parent=1 // pred_check
      _
    $region27: #{tpu_custom_call.1} parent=1 // pred_check_branch
      %71 = sbr.rel (0) target = $region29
    $region28: #{tpu_custom_call.1} parent=1 // pred_region
      _
    $region29: #{tpu_custom_call.1} parent=1 // pred_fallthru
      _
    // Predicated region
    $region30: #{tpu_custom_call.1} parent=1 // pred_check
      _
    $region31: #{tpu_custom_call.1} parent=1 // pred_check_branch
      %73 = sbr.rel (0) target = $region33
    $region32: #{tpu_custom_call.1} parent=1 // pred_region
      %75 = dma.done [#allocation3], 512
    $region33: #{tpu_custom_call.1} parent=1 // pred_fallthru
      _
    // Predicated region
    $region34: #{tpu_custom_call.1} parent=1 // pred_check
      _
    $region35: #{tpu_custom_call.1} parent=1 // pred_check_branch
      %77 = sbr.rel (0) target = $region37
    $region36: #{tpu_custom_call.1} parent=1 // pred_region
      %79 = dma.done [#allocation6], 16
    $region37: #{tpu_custom_call.1} parent=1 // pred_fallthru
      _
    // Predicated region
    $region38: #{tpu_custom_call.1} parent=1 // pred_check
      _
    $region39: #{tpu_custom_call.1} parent=1 // pred_check_branch
      %81 = sbr.rel (0) target = $region41
    $region40: #{tpu_custom_call.1} parent=1 // pred_region
      %83 = dma.done [#allocation6], 2048
    $region41: #{tpu_custom_call.1} parent=1 // pred_fallthru
      _
    // Predicated region
    $region42: #{tpu_custom_call.1} parent=1 // pred_check
      _
    $region43: #{tpu_custom_call.1} parent=1 // pred_check_branch
      %85 = sbr.rel (0) target = $region45
    $region44: #{tpu_custom_call.1} parent=1 // pred_region
      %87 = dma.done [#allocation9], 2048
    $region45: #{tpu_custom_call.1} parent=1 // pred_fallthru
      _
    %v88 = vld [vmem:[#allocation2] sm:$0xff]
    %v89 = vld [vmem:[#allocation2 + $0x8] sm:$0xff]
    %v90 = vld [vmem:[#allocation2 + $0x10] sm:$0xff]
    %v91 = vld [vmem:[#allocation2 + $0x18] sm:$0xff]
    %92 = vadd.xlane.f32.xlu0 %v88
    %v93 = vpop.xlane.xlu0 %92
    %94 = vadd.xlane.f32.xlu0 %v89
    %v95 = vpop.xlane.xlu0 %94
    %96 = vadd.xlane.f32.xlu0 %v90
    %v97 = vpop.xlane.xlu0 %96
    %98 = vadd.xlane.f32.xlu0 %v91
    %v99 = vpop.xlane.xlu0 %98
    %v100 = vrcp.pop 128.0
    %v101 = vmul.f32 128.0, %v100
    %v102 = vsub.f32 1.0, %v101
    %v103 = vmul.f32 %v100, %v102
    %v104 = vadd.f32 %v100, %v103
    %vm105 = vweird.f32 %v100
    %v106 = vsel %vm105, %v100, %v104
    %v107 = vmul.f32 %v93, %v106
    %v108 = vmul.f32 %v95, %v106
    %v109 = vmul.f32 %v97, %v106
    %v110 = vmul.f32 %v99, %v106
    %v111 = vsub.f32 %v88, %v107
    %v112 = vsub.f32 %v89, %v108
    %v113 = vsub.f32 %v90, %v109
    %v114 = vsub.f32 %v91, %v110
    %v115 = vmul.f32 %v111, %v111
    %v116 = vmul.f32 %v112, %v112
    %v117 = vmul.f32 %v113, %v113
    %v118 = vmul.f32 %v114, %v114
    %119 = vadd.xlane.f32.xlu0 %v115
    %v120 = vpop.xlane.xlu0 %119
    %121 = vadd.xlane.f32.xlu0 %v116
    %v122 = vpop.xlane.xlu0 %121
    %123 = vadd.xlane.f32.xlu0 %v117
    %v124 = vpop.xlane.xlu0 %123
    %125 = vadd.xlane.f32.xlu0 %v118
    %v126 = vpop.xlane.xlu0 %125
    %v127 = vrcp.pop 127.0
    %v128 = vmul.f32 127.0, %v127
    %v129 = vsub.f32 1.0, %v128
    %v130 = vmul.f32 %v127, %v129
    %v131 = vadd.f32 %v127, %v130
    %vm132 = vweird.f32 %v127
    %v133 = vsel %vm132, %v127, %v131
    %v134 = vmul.f32 %v120, %v133
    %v135 = vmul.f32 %v122, %v133
    %v136 = vmul.f32 %v124, %v133
    %v137 = vmul.f32 %v126, %v133
    %v138 = vrsqrt.pop %v134
    %v139 = vmul.f32 %v138, %v134
    %v140 = vmul.f32 %v139, %v138
    %v141 = vmul.f32 0.5, %v140
    %v142 = vsub.f32 1.5, %v141
    %v143 = vmul.f32 %v138, %v142
    %v144 = vmul.f32 %v134, %v143
    %vm145 = vcmp.eq.f32.partialorder %v134, inf
    %v146 = vsel %vm145, %v134, %v144
    %vm147 = vcmp.eq.f32.partialorder %v134, 0.0
    %v148 = vand.u32 %v134, 2147483648
    %v149 = vsel %vm147, %v148, %v146
    %v150 = vrsqrt.pop %v135
    %v151 = vmul.f32 %v150, %v135
    %v152 = vmul.f32 %v151, %v150
    %v153 = vmul.f32 0.5, %v152
    %v154 = vsub.f32 1.5, %v153
    %v155 = vmul.f32 %v150, %v154
    %v156 = vmul.f32 %v135, %v155
    %vm157 = vcmp.eq.f32.partialorder %v135, inf
    %v158 = vsel %vm157, %v135, %v156
    %vm159 = vcmp.eq.f32.partialorder %v135, 0.0
    %v160 = vand.u32 %v135, 2147483648
    %v161 = vsel %vm159, %v160, %v158
    %v162 = vrsqrt.pop %v136
    %v163 = vmul.f32 %v162, %v136
    %v164 = vmul.f32 %v163, %v162
    %v165 = vmul.f32 0.5, %v164
    %v166 = vsub.f32 1.5, %v165
    %v167 = vmul.f32 %v162, %v166
    %v168 = vmul.f32 %v136, %v167
    %vm169 = vcmp.eq.f32.partialorder %v136, inf
    %v170 = vsel %vm169, %v136, %v168
    %vm171 = vcmp.eq.f32.partialorder %v136, 0.0
    %v172 = vand.u32 %v136, 2147483648
    %v173 = vsel %vm171, %v172, %v170
    %v174 = vrsqrt.pop %v137
    %v175 = vmul.f32 %v174, %v137
    %v176 = vmul.f32 %v175, %v174
    %v177 = vmul.f32 0.5, %v176
    %v178 = vsub.f32 1.5, %v177
    %v179 = vmul.f32 %v174, %v178
    %v180 = vmul.f32 %v137, %v179
    %vm181 = vcmp.eq.f32.partialorder %v137, inf
    %v182 = vsel %vm181, %v137, %v180
    %vm183 = vcmp.eq.f32.partialorder %v137, 0.0
    %v184 = vand.u32 %v137, 2147483648
    %v185 = vsel %vm183, %v184, %v182
    %v186 = vadd.f32 %v149, 1e-06
    %v187 = vadd.f32 %v161, 1e-06
    %v188 = vadd.f32 %v173, 1e-06
    %v189 = vadd.f32 %v185, 1e-06
    %v190 = vrcp.pop %v186
    %v191 = vmul.f32 %v186, %v190
    %v192 = vsub.f32 1.0, %v191
    %v193 = vmul.f32 %v190, %v192
    %v194 = vadd.f32 %v190, %v193
    %vm195 = vweird.f32 %v186
    %vm196 = vweird.f32 %v190
    %vm197 = vmor %vm195, %vm196
    %v198 = vsel %vm197, %v190, %v194
    %v199 = vand.u32 2147483647, %v186
    %vm200 = vcmp.eq.f32.partialorder %v199, 8.507059e+37
    %v201 = vand.u32 %v186, 2147483648
    %v202 = vor.u32 1.1754944e-38, %v201
    %v203 = vsel %vm200, %v202, %v198
    %v204 = vmul.f32 1.0, %v203
    %v205 = vrcp.pop %v187
    %v206 = vmul.f32 %v187, %v205
    %v207 = vsub.f32 1.0, %v206
    %v208 = vmul.f32 %v205, %v207
    %v209 = vadd.f32 %v205, %v208
    %vm210 = vweird.f32 %v187
    %vm211 = vweird.f32 %v205
    %vm212 = vmor %vm210, %vm211
    %v213 = vsel %vm212, %v205, %v209
    %v214 = vand.u32 2147483647, %v187
    %vm215 = vcmp.eq.f32.partialorder %v214, 8.507059e+37
    %v216 = vand.u32 %v187, 2147483648
    %v217 = vor.u32 1.1754944e-38, %v216
    %v218 = vsel %vm215, %v217, %v213
    %v219 = vmul.f32 1.0, %v218
    %v220 = vrcp.pop %v188
    %v221 = vmul.f32 %v188, %v220
    %v222 = vsub.f32 1.0, %v221
    %v223 = vmul.f32 %v220, %v222
    %v224 = vadd.f32 %v220, %v223
    %vm225 = vweird.f32 %v188
    %vm226 = vweird.f32 %v220
    %vm227 = vmor %vm225, %vm226
    %v228 = vsel %vm227, %v220, %v224
    %v229 = vand.u32 2147483647, %v188
    %vm230 = vcmp.eq.f32.partialorder %v229, 8.507059e+37
    %v231 = vand.u32 %v188, 2147483648
    %v232 = vor.u32 1.1754944e-38, %v231
    %v233 = vsel %vm230, %v232, %v228
    %v234 = vmul.f32 1.0, %v233
    %v235 = vrcp.pop %v189
    %v236 = vmul.f32 %v189, %v235
    %v237 = vsub.f32 1.0, %v236
    %v238 = vmul.f32 %v235, %v237
    %v239 = vadd.f32 %v235, %v238
    %vm240 = vweird.f32 %v189
    %vm241 = vweird.f32 %v235
    %vm242 = vmor %vm240, %vm241
    %v243 = vsel %vm242, %v235, %v239
    %v244 = vand.u32 2147483647, %v189
    %vm245 = vcmp.eq.f32.partialorder %v244, 8.507059e+37
    %v246 = vand.u32 %v189, 2147483648
    %v247 = vor.u32 1.1754944e-38, %v246
    %v248 = vsel %vm245, %v247, %v243
    %v249 = vmul.f32 1.0, %v248
    %v250 = vld [vmem:[#allocation5] sm:$0x1]
    %v251 = vmul.f32 %v111, %v204
    %v252 = vmul.f32 %v112, %v219
    %v253 = vmul.f32 %v113, %v234
    %v254 = vmul.f32 %v114, %v249
    %v256 = vperm.slane %v250, 0
    %v258 = vmul.f32 %v256, %v251
    %v259 = vmul.f32 %v256, %v252
    %v260 = vmul.f32 %v256, %v253
    %v261 = vmul.f32 %v256, %v254
    %v262 = vld [vmem:[%s2] sm:$0x1]
    %v264 = vperm.slane %v262, 0
    %v266 = vadd.f32 %v258, %v264
    %v267 = vadd.f32 %v259, %v264
    %v268 = vadd.f32 %v260, %v264
    %v269 = vadd.f32 %v261, %v264
    %v270 = vpack.c.bf16 %v267, %v266
    %v271 = vpack.c.bf16 %v269, %v268
    %v272 = vld [vmem:[#allocation7] sm:$0xff]
    %v273 = vld [vmem:[#allocation7 + $0x8] sm:$0xff]
    %v274 = vld [vmem:[#allocation7 + $0x10] sm:$0xff]
    %v275 = vld [vmem:[#allocation7 + $0x18] sm:$0xff]
    %v276 = vld [vmem:[#allocation7 + $0x20] sm:$0xff]
    %v277 = vld [vmem:[#allocation7 + $0x28] sm:$0xff]
    %v278 = vld [vmem:[#allocation7 + $0x30] sm:$0xff]
    %v279 = vld [vmem:[#allocation7 + $0x38] sm:$0xff]
    %v280 = vld [vmem:[#allocation7 + $0x40] sm:$0xff]
    %v281 = vld [vmem:[#allocation7 + $0x48] sm:$0xff]
    %v282 = vld [vmem:[#allocation7 + $0x50] sm:$0xff]
    %v283 = vld [vmem:[#allocation7 + $0x58] sm:$0xff]
    %v284 = vld [vmem:[#allocation7 + $0x60] sm:$0xff]
    %v285 = vld [vmem:[#allocation7 + $0x68] sm:$0xff]
    %v286 = vld [vmem:[#allocation7 + $0x70] sm:$0xff]
    %v287 = vld [vmem:[#allocation7 + $0x78] sm:$0xff]
    %v288 = vld [vmem:[%s4] sm:$0x3]
    %v290 = vperm.slane %v288, 0
    %v291 = vperm.slane %v288, 1
    %v310 = vunpack.c.l.b16 %v272
    %v311 = vunpack.c.h.b16 %v272
    %v312 = vunpack.c.l.b16 %v273
    %v313 = vunpack.c.h.b16 %v273
    %v314 = vunpack.c.l.b16 %v274
    %v315 = vunpack.c.h.b16 %v274
    %v316 = vunpack.c.l.b16 %v275
    %v317 = vunpack.c.h.b16 %v275
    %v318 = vunpack.c.l.b16 %v276
    %v319 = vunpack.c.h.b16 %v276
    %v320 = vunpack.c.l.b16 %v277
    %v321 = vunpack.c.h.b16 %v277
    %v322 = vunpack.c.l.b16 %v278
    %v323 = vunpack.c.h.b16 %v278
    %v324 = vunpack.c.l.b16 %v279
    %v325 = vunpack.c.h.b16 %v279
    %v326 = vunpack.c.l.b16 %v280
    %v327 = vunpack.c.h.b16 %v280
    %v328 = vunpack.c.l.b16 %v281
    %v329 = vunpack.c.h.b16 %v281
    %v330 = vunpack.c.l.b16 %v282
    %v331 = vunpack.c.h.b16 %v282
    %v332 = vunpack.c.l.b16 %v283
    %v333 = vunpack.c.h.b16 %v283
    %v334 = vunpack.c.l.b16 %v284
    %v335 = vunpack.c.h.b16 %v284
    %v336 = vunpack.c.l.b16 %v285
    %v337 = vunpack.c.h.b16 %v285
    %v338 = vunpack.c.l.b16 %v286
    %v339 = vunpack.c.h.b16 %v286
    %v340 = vunpack.c.l.b16 %v287
    %v341 = vunpack.c.h.b16 %v287
    %v342 = vpack.c.b16 %v312, %v310
    %v343 = vpack.c.b16 %v313, %v311
    %v344 = vpack.c.b16 %v316, %v314
    %v345 = vpack.c.b16 %v317, %v315
    %v346 = vpack.c.b16 %v320, %v318
    %v347 = vpack.c.b16 %v321, %v319
    %v348 = vpack.c.b16 %v324, %v322
    %v349 = vpack.c.b16 %v325, %v323
    %v350 = vpack.c.b16 %v328, %v326
    %v351 = vpack.c.b16 %v329, %v327
    %v352 = vpack.c.b16 %v332, %v330
    %v353 = vpack.c.b16 %v333, %v331
    %v354 = vpack.c.b16 %v336, %v334
    %v355 = vpack.c.b16 %v337, %v335
    %v356 = vpack.c.b16 %v340, %v338
    %v357 = vpack.c.b16 %v341, %v339
    %374 = vmatpush.bf16.msra.mxu0 %v356
    %375 = vmatpush.bf16.msra.mxu0 %v354
    %376 = vmatpush.bf16.msra.mxu0 %v352
    %377 = vmatpush.bf16.msra.mxu0 %v350
    %378 = vmatpush.bf16.msra.mxu0 %v348
    %379 = vmatpush.bf16.msra.mxu0 %v346
    %380 = vmatpush.bf16.msra.mxu0 %v344
    %381 = vmatpush.bf16.msra.mxu0 %v342
    %382 = vmatmul.bf16.gmra.mxu0 %v270
    %v383 = vpop.f32.mrf.mxu0
    %v384 = vadd.f32 %v290, %v383
    %v385 = vpop.f32.mrf.mxu0
    %v386 = vadd.f32 %v290, %v385
    %387 = vmatmul.bf16.gmra.mxu0 %v271
    %v388 = vpop.f32.mrf.mxu0
    %v389 = vadd.f32 %v290, %v388
    %v390 = vpop.f32.mrf.mxu0
    %v391 = vadd.f32 %v290, %v390
    %392 = vdwg.mxu0
    %393 = vmatpush.bf16.msra.mxu0 %v357
    %394 = vmatpush.bf16.msra.mxu0 %v355
    %395 = vmatpush.bf16.msra.mxu0 %v353
    %396 = vmatpush.bf16.msra.mxu0 %v351
    %397 = vmatpush.bf16.msra.mxu0 %v349
    %398 = vmatpush.bf16.msra.mxu0 %v347
    %399 = vmatpush.bf16.msra.mxu0 %v345
    %400 = vmatpush.bf16.msra.mxu0 %v343
    %401 = vmatmul.bf16.gmra.mxu0 %v270
    %v402 = vpop.f32.mrf.mxu0
    %v403 = vadd.f32 %v291, %v402
    %v404 = vpop.f32.mrf.mxu0
    %v405 = vadd.f32 %v291, %v404
    %406 = vmatmul.bf16.gmra.mxu0 %v271
    %v407 = vpop.f32.mrf.mxu0
    %v408 = vadd.f32 %v291, %v407
    %v409 = vpop.f32.mrf.mxu0
    %v410 = vadd.f32 %v291, %v409
    %411 = vdwg.mxu0
    %v412 = vmax.f32 %v384, 0.0
    %v413 = vmax.f32 %v403, 0.0
    %v414 = vmax.f32 %v386, 0.0
    %v415 = vmax.f32 %v405, 0.0
    %v416 = vmax.f32 %v389, 0.0
    %v417 = vmax.f32 %v408, 0.0
    %v418 = vmax.f32 %v391, 0.0
    %v419 = vmax.f32 %v410, 0.0
    %v420 = vpack.c.bf16 %v414, %v412
    %v421 = vpack.c.bf16 %v415, %v413
    %v422 = vpack.c.bf16 %v418, %v416
    %v423 = vpack.c.bf16 %v419, %v417
    %v424 = vld [vmem:[#allocation8] sm:$0xf]
    %v425 = vld [vmem:[#allocation8 + $0x4] sm:$0xf]
    %v426 = vld [vmem:[#allocation8 + $0x8] sm:$0xf]
    %v427 = vld [vmem:[#allocation8 + $0xc] sm:$0xf]
    %v428 = vld [vmem:[#allocation8 + $0x10] sm:$0xf]
    %v429 = vld [vmem:[#allocation8 + $0x14] sm:$0xf]
    %v430 = vld [vmem:[#allocation8 + $0x18] sm:$0xf]
    %v431 = vld [vmem:[#allocation8 + $0x1c] sm:$0xf]
    %v432 = vld [vmem:[#allocation8 + $0x20] sm:$0xf]
    %v433 = vld [vmem:[#allocation8 + $0x24] sm:$0xf]
    %v434 = vld [vmem:[#allocation8 + $0x28] sm:$0xf]
    %v435 = vld [vmem:[#allocation8 + $0x2c] sm:$0xf]
    %v436 = vld [vmem:[#allocation8 + $0x30] sm:$0xf]
    %v437 = vld [vmem:[#allocation8 + $0x34] sm:$0xf]
    %v438 = vld [vmem:[#allocation8 + $0x38] sm:$0xf]
    %v439 = vld [vmem:[#allocation8 + $0x3c] sm:$0xf]
    %v440 = vld [vmem:[#allocation8 + $0x40] sm:$0xf]
    %v441 = vld [vmem:[#allocation8 + $0x44] sm:$0xf]
    %v442 = vld [vmem:[#allocation8 + $0x48] sm:$0xf]
    %v443 = vld [vmem:[#allocation8 + $0x4c] sm:$0xf]
    %v444 = vld [vmem:[#allocation8 + $0x50] sm:$0xf]
    %v445 = vld [vmem:[#allocation8 + $0x54] sm:$0xf]
    %v446 = vld [vmem:[#allocation8 + $0x58] sm:$0xf]
    %v447 = vld [vmem:[#allocation8 + $0x5c] sm:$0xf]
    %v448 = vld [vmem:[#allocation8 + $0x60] sm:$0xf]
    %v449 = vld [vmem:[#allocation8 + $0x64] sm:$0xf]
    %v450 = vld [vmem:[#allocation8 + $0x68] sm:$0xf]
    %v451 = vld [vmem:[#allocation8 + $0x6c] sm:$0xf]
    %v452 = vld [vmem:[#allocation8 + $0x70] sm:$0xf]
    %v453 = vld [vmem:[#allocation8 + $0x74] sm:$0xf]
    %v454 = vld [vmem:[#allocation8 + $0x78] sm:$0xf]
    %v455 = vld [vmem:[#allocation8 + $0x7c] sm:$0xf]
    %v456 = vld [vmem:[%s6] sm:$0x1]
    %v458 = vperm.slane %v456, 0
    %v492 = vunpack.c.l.b16 %v424
    %v493 = vunpack.c.l.b16 %v425
    %v494 = vunpack.c.l.b16 %v426
    %v495 = vunpack.c.l.b16 %v427
    %v496 = vunpack.c.l.b16 %v428
    %v497 = vunpack.c.l.b16 %v429
    %v498 = vunpack.c.l.b16 %v430
    %v499 = vunpack.c.l.b16 %v431
    %v500 = vunpack.c.l.b16 %v432
    %v501 = vunpack.c.l.b16 %v433
    %v502 = vunpack.c.l.b16 %v434
    %v503 = vunpack.c.l.b16 %v435
    %v504 = vunpack.c.l.b16 %v436
    %v505 = vunpack.c.l.b16 %v437
    %v506 = vunpack.c.l.b16 %v438
    %v507 = vunpack.c.l.b16 %v439
    %v508 = vunpack.c.l.b16 %v440
    %v509 = vunpack.c.l.b16 %v441
    %v510 = vunpack.c.l.b16 %v442
    %v511 = vunpack.c.l.b16 %v443
    %v512 = vunpack.c.l.b16 %v444
    %v513 = vunpack.c.l.b16 %v445
    %v514 = vunpack.c.l.b16 %v446
    %v515 = vunpack.c.l.b16 %v447
    %v516 = vunpack.c.l.b16 %v448
    %v517 = vunpack.c.l.b16 %v449
    %v518 = vunpack.c.l.b16 %v450
    %v519 = vunpack.c.l.b16 %v451
    %v520 = vunpack.c.l.b16 %v452
    %v521 = vunpack.c.l.b16 %v453
    %v522 = vunpack.c.l.b16 %v454
    %v523 = vunpack.c.l.b16 %v455
    %v524 = vpack.c.b16 %v493, %v492
    %v525 = vpack.c.b16 %v495, %v494
    %v526 = vpack.c.b16 %v497, %v496
    %v527 = vpack.c.b16 %v499, %v498
    %v528 = vpack.c.b16 %v501, %v500
    %v529 = vpack.c.b16 %v503, %v502
    %v530 = vpack.c.b16 %v505, %v504
    %v531 = vpack.c.b16 %v507, %v506
    %v532 = vpack.c.b16 %v509, %v508
    %v533 = vpack.c.b16 %v511, %v510
    %v534 = vpack.c.b16 %v513, %v512
    %v535 = vpack.c.b16 %v515, %v514
    %v536 = vpack.c.b16 %v517, %v516
    %v537 = vpack.c.b16 %v519, %v518
    %v538 = vpack.c.b16 %v521, %v520
    %v539 = vpack.c.b16 %v523, %v522
    %556 = vmatpush.bf16.msra.mxu0 %v531
    %557 = vmatpush.bf16.msra.mxu0 %v530
    %558 = vmatpush.bf16.msra.mxu0 %v529
    %559 = vmatpush.bf16.msra.mxu0 %v528
    %560 = vmatpush.bf16.msra.mxu0 %v527
    %561 = vmatpush.bf16.msra.mxu0 %v526
    %562 = vmatpush.bf16.msra.mxu0 %v525
    %563 = vmatpush.bf16.msra.mxu0 %v524
    %564 = vmatmul.bf16.gmra.mxu0 %v420
    %v565 = vpop.f32.mrf.mxu0
    %v566 = vadd.f32 %v458, %v565
    %v567 = vpop.f32.mrf.mxu0
    %v568 = vadd.f32 %v458, %v567
    %569 = vmatmul.bf16.gmra.mxu0 %v422
    %v570 = vpop.f32.mrf.mxu0
    %v571 = vadd.f32 %v458, %v570
    %v572 = vpop.f32.mrf.mxu0
    %v573 = vadd.f32 %v458, %v572
    %574 = vdwg.mxu0
    %575 = vmatpush.bf16.msra.mxu0 %v539
    %576 = vmatpush.bf16.msra.mxu0 %v538
    %577 = vmatpush.bf16.msra.mxu0 %v537
    %578 = vmatpush.bf16.msra.mxu0 %v536
    %579 = vmatpush.bf16.msra.mxu0 %v535
    %580 = vmatpush.bf16.msra.mxu0 %v534
    %581 = vmatpush.bf16.msra.mxu0 %v533
    %582 = vmatpush.bf16.msra.mxu0 %v532
    %583 = vmatmul.bf16.gmra.mxu0 %v421
    %v584 = vpop.f32.mrf.mxu0
    %v585 = vadd.f32 %v566, %v584
    %v586 = vpop.f32.mrf.mxu0
    %v587 = vadd.f32 %v568, %v586
    %588 = vmatmul.bf16.gmra.mxu0 %v423
    %v589 = vpop.f32.mrf.mxu0
    %v590 = vadd.f32 %v571, %v589
    %v591 = vpop.f32.mrf.mxu0
    %v592 = vadd.f32 %v573, %v591
    %593 = vdwg.mxu0
    %v594 = vadd.f32 %v88, %v585
    %v595 = vadd.f32 %v89, %v587
    %v596 = vadd.f32 %v90, %v590
    %v597 = vadd.f32 %v91, %v592
    %598 = vst [vmem:[#allocation10] sm:$0xff] %v594
    %599 = vst [vmem:[#allocation10 + $0x8] sm:$0xff] %v595
    %600 = vst [vmem:[#allocation10 + $0x10] sm:$0xff] %v596
    %601 = vst [vmem:[#allocation10 + $0x18] sm:$0xff] %v597
    // Predicated region
    $region46: #{tpu_custom_call.1} parent=1 // pred_check
      _
    $region47: #{tpu_custom_call.1} parent=1 // pred_check_branch
      %603 = sbr.rel (0) target = $region49
    $region48: #{tpu_custom_call.1} parent=1 // pred_region
      %605 = vsyncadd [#allocation4], 0
      %s606 = sshll.u32 [#allocation10], 4
      %s607 = int_to_ptr.vmem [resolvable:$true] %s606
      %s608 = sshll.u32 %s7, 4
      %s609 = int_to_ptr.hbm [resolvable:$true] %s608
      %614 = dma.vmem_to_hbm [thread:$0]  %s607, 512, %s609, [#allocation4], 128, 128, 8
    $region49: #{tpu_custom_call.1} parent=1 // pred_fallthru
      _
    // Predicated region
    $region50: #{tpu_custom_call.1} parent=1 // pred_check
      _
    $region51: #{tpu_custom_call.1} parent=1 // pred_check_branch
      %616 = sbr.rel (0) target = $region53
    $region52: #{tpu_custom_call.1} parent=1 // pred_region
      %618 = dma.done [#allocation4], 512
    $region53: #{tpu_custom_call.1} parent=1 // pred_fallthru
      _
    %619 = vsyncpa [#allocation3], 1
    %620 = vsyncpa [#allocation6], 1
    %621 = vsyncpa [#allocation9], 1
    %622 = vsyncpa [#allocation4], 1

</llo_original>
